<compile_context>
chip_gen: v6e
topology: v6e:2x2x1
jax: 0.10.0
libtpu: 0.0.40
codegen_flags: <defaults>
</compile_context>

<pallas_src>
import functools
import math

import jax
import jax.numpy as jnp
import numpy as np
from jax.experimental import pallas as pl
from jax.experimental.pallas import tpu as pltpu


# ----------------------------- helpers -------------------------------------

def _pick_tile(dim, candidates):
    """Largest candidate tile that exactly divides `dim`, else the full dim."""
    for c in candidates:
        if c <= dim and dim % c == 0:
            return c
    return dim


# ----------------------------- Pallas kernels ------------------------------

def linear_kernel(x_ref, w_ref, b_ref, o_ref, acc_ref):
    # x: [tm, tk] bf16, w: [tk, tn] bf16, b: [1, tn] f32 -> o: [tm, tn].
    k = pl.program_id(2)

    @pl.when(k == 0)
    def _():
        acc_ref[...] = jnp.zeros_like(acc_ref)

    acc_ref[...] += jnp.dot(x_ref[...], w_ref[...],
                            preferred_element_type=jnp.float32)

    @pl.when(k == pl.num_programs(2) - 1)
    def _():
        o_ref[...] = (acc_ref[...] + b_ref[...]).astype(o_ref.dtype)


def flash_attn_kernel(q_ref, k_ref, v_ref, o_ref, m_sc, l_sc, acc_sc, *,
                      kv_chunk):
    # q_ref: [tq, HD] bf16 (already scaled by 1/sqrt(HD));
    # k_ref/v_ref: [S, HD] bf16, resident in VMEM for this (batch, head).
    qi = pl.program_id(2)
    q = q_ref[...]
    tq, HD = q.shape
    neg = jnp.finfo(jnp.float32).min

    # Per-q-tile online-softmax state (no cross-grid-step carry needed).
    m_sc[...] = jnp.full_like(m_sc, -jnp.inf)
    l_sc[...] = jnp.zeros_like(l_sc)
    acc_sc[...] = jnp.zeros_like(acc_sc)

    q_start = qi * tq
    # Chunks fully below the diagonal: no masking work at all.
    n_full = (q_start + 1) // kv_chunk
    # Last chunk that contains any unmasked (col <= row) element.
    n_total = pl.cdiv(q_start + tq, kv_chunk)

    def make_body(masked):
        def body(ci, carry):
            start = pl.multiple_of(ci * kv_chunk, kv_chunk)
            k = k_ref[pl.ds(start, kv_chunk), :]     # [kv_chunk, HD] bf16
            v = v_ref[pl.ds(start, kv_chunk), :]     # [kv_chunk, HD] bf16
            # QK^T contracting last dims (no k.T materialized), f32 accumulate.
            s = jax.lax.dot_general(q, k, (((1,), (1,)), ((), ())),
                                    preferred_element_type=jnp.float32)
            if masked:
                row = q_start + jax.lax.broadcasted_iota(
                    jnp.int32, (tq, kv_chunk), 0)
                col = start + jax.lax.broadcasted_iota(
                    jnp.int32, (tq, kv_chunk), 1)
                s = jnp.where(col > row, neg, s)
            m_prev = m_sc[...]
            m_new = jnp.maximum(m_prev, jnp.max(s, axis=-1, keepdims=True))
            alpha = jnp.exp(m_prev - m_new)
            p = jnp.exp(s - m_new)
            l_sc[...] = alpha * l_sc[...] + jnp.sum(p, axis=-1, keepdims=True)
            acc_sc[...] = alpha * acc_sc[...] + jnp.dot(
                p.astype(jnp.bfloat16), v, preferred_element_type=jnp.float32)
            m_sc[...] = m_new
            return carry
        return body

    # Strictly-lower chunks: no mask generation / select at all.
    jax.lax.fori_loop(0, n_full, make_body(False), 0)
    # Diagonal-overlapping chunks: causal mask from broadcasted_iota.
    jax.lax.fori_loop(n_full, n_total, make_body(True), 0)

    inv = pl.reciprocal(l_sc[...], approx=True)
    o_ref[...] = (acc_sc[...] * inv).astype(o_ref.dtype)


# ----------------------------- wrappers ------------------------------------

def pallas_linear(x_bf16, w_bf16, b_f32, out_dtype=jnp.bfloat16):
    M, K = x_bf16.shape
    _, N = w_bf16.shape
    tm = _pick_tile(M, (512, 256, 128, 64, 32, 16, 8))
    tk = _pick_tile(K, (512, 256, 128))
    tn = _pick_tile(N, (512, 256, 128))
    grid = (M // tm, N // tn, K // tk)

    out_bytes = jnp.dtype(out_dtype).itemsize
    cost = pl.CostEstimate(
        flops=2 * M * N * K,
        transcendentals=0,
        bytes_accessed=M * K * 2 + K * N * 2 + M * N * out_bytes + N * 4)

    return pl.pallas_call(
        linear_kernel,
        out_shape=jax.ShapeDtypeStruct((M, N), out_dtype),
        grid=grid,
        in_specs=[
            pl.BlockSpec((tm, tk), lambda i, j, k: (i, k)),
            pl.BlockSpec((tk, tn), lambda i, j, k: (k, j)),
            pl.BlockSpec((1, tn), lambda i, j, k: (0, j)),
        ],
        out_specs=pl.BlockSpec((tm, tn), lambda i, j, k: (i, j)),
        scratch_shapes=[pltpu.VMEM((tm, tn), jnp.float32)],
        compiler_params=pltpu.CompilerParams(
            dimension_semantics=("parallel", "parallel", "arbitrary"),
            vmem_limit_bytes=32 * 1024 * 1024),
        cost_estimate=cost,
    )(x_bf16, w_bf16, b_f32.reshape(1, N))


def pallas_flash_attention(q, k, v):
    # q, k, v: [B, NH, S, HD] bf16; q is pre-scaled by 1/sqrt(HD) and rotary
    # is already applied to q, k.
    B, NH, S, HD = q.shape
    tq = _pick_tile(S, (256, 128, 64, 32, 16, 8))
    # Cap kv chunk at 128 so the f32 [tq, kv_chunk] scores/probs stay <=128 KiB.
    kv_chunk = _pick_tile(S, (128, 64, 32, 16, 8))
    nq = S // tq

    kernel = functools.partial(flash_attn_kernel, kv_chunk=kv_chunk)
    cost = pl.CostEstimate(
        flops=2 * B * NH * S * S * HD,            # ~causal half of 4*S^2*HD
        transcendentals=B * NH * S * S // 2,
        bytes_accessed=4 * B * NH * S * HD * 2)

    # Resident K+V (double-buffered, bf16) plus headroom; fits v7x's 64 MiB.
    kv_resident = 2 * 2 * S * HD * 2
    vmem_limit = max(32 * 1024 * 1024, kv_resident + 16 * 1024 * 1024)

    return pl.pallas_call(
        kernel,
        out_shape=jax.ShapeDtypeStruct((B, NH, S, HD), jnp.bfloat16),
        grid=(B, NH, nq),
        in_specs=[
            pl.BlockSpec((None, None, tq, HD), lambda b, h, qi: (b, h, qi, 0)),
            # K/V block index is constant across qi -> fetched once per (b, h).
            pl.BlockSpec((None, None, S, HD), lambda b, h, qi: (b, h, 0, 0)),
            pl.BlockSpec((None, None, S, HD), lambda b, h, qi: (b, h, 0, 0)),
        ],
        out_specs=pl.BlockSpec((None, None, tq, HD),
                               lambda b, h, qi: (b, h, qi, 0)),
        scratch_shapes=[
            pltpu.VMEM((tq, 1), jnp.float32),    # running max m
            pltpu.VMEM((tq, 1), jnp.float32),    # running denom l
            pltpu.VMEM((tq, HD), jnp.float32),   # running accumulator
        ],
        compiler_params=pltpu.CompilerParams(
            dimension_semantics=("parallel", "parallel", "parallel"),
            vmem_limit_bytes=vmem_limit),
        cost_estimate=cost,
    )(q, k, v)


# ----------------------------- module --------------------------------------

class GPTNeoXAttentionPallas:
    """Mirror of HF GPTNeoXAttention forward (no layer_past / head_mask,
    use_cache=False, causal attention mask generated in-kernel)."""

    def __init__(self, hidden_size, num_heads, max_position_embeddings,
                 rotary_pct=0.25, rotary_emb_base=10000, key=None):
        self.hidden_size = hidden_size
        self.num_attention_heads = num_heads
        self.head_size = hidden_size // num_heads
        self.rotary_ndims = int(self.head_size * rotary_pct)
        self.max_positions = max_position_embeddings
        self.inv_norm_factor = float(1.0 / math.sqrt(self.head_size))

        key = jax.random.PRNGKey(0) if key is None else key
        k1, k2, k3, k4 = jax.random.split(key, 4)
        bound = 1.0 / math.sqrt(hidden_size)
        # Canonical HF layout: per-head [q_h | k_h | v_h] output-column blocks.
        self.w_qkv = jax.random.uniform(
            k1, (hidden_size, 3 * hidden_size), jnp.float32, -bound, bound)
        self.b_qkv = jax.random.uniform(
            k2, (3 * hidden_size,), jnp.float32, -bound, bound)
        self.w_dense = jax.random.uniform(
            k3, (hidden_size, hidden_size), jnp.float32, -bound, bound)
        self.b_dense = jax.random.uniform(
            k4, (hidden_size,), jnp.float32, -bound, bound)

        # Pallas-path copies: columns permuted to [3, NH, HD] layout so q/k/v
        # split on a leading axis (no sub-128 minor-dim slices), bf16 weights.
        NH, HD = num_heads, self.head_size
        w_perm = self.w_qkv.reshape(hidden_size, NH, 3, HD).transpose(0, 2, 1, 3)
        self.w_qkv_perm_bf16 = w_perm.reshape(
            hidden_size, 3 * hidden_size).astype(jnp.bfloat16)
        self.b_qkv_perm = self.b_qkv.reshape(NH, 3, HD).transpose(
            1, 0, 2).reshape(3 * hidden_size)
        self.w_dense_bf16 = self.w_dense.astype(jnp.bfloat16)

        # Rotary cos/sin cache (RotaryEmbedding._create_cos_sin), [max_pos, ROT].
        dim = self.rotary_ndims
        inv_freq = 1.0 / (rotary_emb_base **
                          (np.arange(0, dim, 2, dtype=np.float32) / dim))
        t = np.arange(max_position_embeddings, dtype=np.float32)
        freqs = np.einsum("i,j->ij", t, inv_freq)
        emb = np.concatenate([freqs, freqs], axis=-1)
        self.cos_cached = jnp.asarray(np.cos(emb), jnp.float32)
        self.sin_cached = jnp.asarray(np.sin(emb), jnp.float32)

    def _apply_rotary(self, x, cos, sin, scale):
        # x: [B, NH, S, HD] bf16; cos/sin: [B, 1, S, ROT] f32. Computed in f32
        # (fused elementwise), `scale` folds the softmax scaling into q.
        ROT = self.rotary_ndims
        half = ROT // 2
        x = x.astype(jnp.float32)
        xr = x[..., :ROT]
        x_rot = jnp.concatenate([-xr[..., half:], xr[..., :half]], axis=-1)
        out = jnp.concatenate([xr * cos + x_rot * sin, x[..., ROT:]], axis=-1)
        return (out * scale).astype(jnp.bfloat16)

    def __call__(self, hidden_states, position_ids, attention_mask=None):
        # hidden_states: [B, S, H]; position_ids: [B, S] int32.
        # attention_mask is ignored: causal masking is generated in-kernel.
        B, S, H = hidden_states.shape
        NH, HD = self.num_attention_heads, self.head_size

        # QKV projection (tiled Pallas matmul, bf16 operands/output, f32 acc).
        x2d = hidden_states.reshape(B * S, H).astype(jnp.bfloat16)
        qkv = pallas_linear(x2d, self.w_qkv_perm_bf16, self.b_qkv_perm,
                            out_dtype=jnp.bfloat16)            # [B*S, 3H] bf16
        qkv = qkv.reshape(B, S, 3, NH, HD)
        q = qkv[:, :, 0].transpose(0, 2, 1, 3)                 # [B, NH, S, HD]
        k = qkv[:, :, 1].transpose(0, 2, 1, 3)
        v = qkv[:, :, 2].transpose(0, 2, 1, 3)

        # Rotary on the first rotary_ndims columns; q additionally pre-scaled
        # by 1/sqrt(head_size) so the kernel never multiplies the score tile.
        cos = self.cos_cached[position_ids][:, None]            # [B,1,S,ROT]
        sin = self.sin_cached[position_ids][:, None]
        q = self._apply_rotary(q, cos, sin, self.inv_norm_factor)
        k = self._apply_rotary(k, cos, sin, 1.0)

        # Flash attention (online softmax, causal tiles skipped, KV resident).
        attn = pallas_flash_attention(q, k, v)                  # [B,NH,S,HD] bf16

        # Merge heads + dense projection (tiled Pallas matmul, f32 output).
        attn2d = attn.transpose(0, 2, 1, 3).reshape(B * S, H)
        out = pallas_linear(attn2d, self.w_dense_bf16, self.b_dense,
                            out_dtype=jnp.float32)
        return out.reshape(B, S, H)


# ----------------------------- reference (plain JAX) ------------------------

def reference_forward(mod, hidden_states, position_ids):
    """Plain-JAX reference mirroring the kernel's bf16-matmul / f32-accumulate
    numerics (causal mask, rotary + q pre-scaling, bf16 qkv intermediate)."""
    B, S, H = hidden_states.shape
    NH, HD, ROT = mod.num_attention_heads, mod.head_size, mod.rotary_ndims
    bf16 = jnp.bfloat16

    x = hidden_states.reshape(B * S, H)
    qkv = (jnp.dot(x.astype(bf16), mod.w_qkv.astype(bf16),
                   preferred_element_type=jnp.float32) + mod.b_qkv).astype(bf16)
    qkv = qkv.reshape(B, S, NH, 3 * HD).transpose(0, 2, 1, 3)
    q, k, v = qkv[..., :HD], qkv[..., HD:2 * HD], qkv[..., 2 * HD:]

    cos = mod.cos_cached[position_ids][:, None]
    sin = mod.sin_cached[position_ids][:, None]
    half = ROT // 2

    def rot(t, scale):
        t = t.astype(jnp.float32)
        tr = t[..., :ROT]
        t_rot = jnp.concatenate([-tr[..., half:], tr[..., :half]], axis=-1)
        out = jnp.concatenate([tr * cos + t_rot * sin, t[..., ROT:]], axis=-1)
        return (out * scale).astype(bf16)

    q = rot(q, mod.inv_norm_factor)
    k = rot(k, 1.0)

    s = jnp.einsum("bhqd,bhkd->bhqk", q, k,
                   preferred_element_type=jnp.float32)
    row = jnp.arange(S)[:, None]
    col = jnp.arange(S)[None, :]
    s = jnp.where(col > row, jnp.finfo(jnp.float32).min, s)

    m = jnp.max(s, axis=-1, keepdims=True)
    p = jnp.exp(s - m)
    l = jnp.sum(p, axis=-1, keepdims=True)
    pv = jnp.einsum("bhqk,bhkd->bhqd", p.astype(bf16), v,
                    preferred_element_type=jnp.float32)
    attn = (pv / l).astype(bf16)

    merged = attn.transpose(0, 2, 1, 3).reshape(B * S, H)
    out = jnp.dot(merged.astype(bf16), mod.w_dense.astype(bf16),
                  preferred_element_type=jnp.float32) + mod.b_dense
    return out.reshape(B, S, H)


# ----------------------------- main -----------------------------------------

if __name__ == "__main__":
    B, S, H, NH = 2, 8, 64, 4          # head_size = 16, rotary_ndims = 4
    MAX_POS = 32

    mod = GPTNeoXAttentionPallas(
        hidden_size=H, num_heads=NH, max_position_embeddings=MAX_POS,
        rotary_pct=0.25, rotary_emb_base=10000, key=jax.random.PRNGKey(0))

    kx, _ = jax.random.split(jax.random.PRNGKey(0))
    hidden_states = jax.random.normal(kx, (B, S, H), jnp.float32)
    position_ids = jnp.broadcast_to(jnp.arange(S, dtype=jnp.int32), (B, S))

    out = mod(hidden_states, position_ids)
    out = jax.block_until_ready(out)

    ref = reference_forward(mod, hidden_states, position_ids)
    np.testing.assert_allclose(np.asarray(out), np.asarray(ref),
                               rtol=1e-2, atol=1e-2)

    print("KERNEL_OK")
</pallas_src>

<mosaic_0001>
module attributes {stable_mosaic.version = 11 : i64} {
  func.func @linear_kernel(%arg0: i32, %arg1: i32, %arg2: i32, %arg3: memref<16x64xbf16, #tpu.memory_space<vmem>>, %arg4: memref<64x192xbf16, #tpu.memory_space<vmem>>, %arg5: memref<1x192xf32, #tpu.memory_space<vmem>>, %arg6: memref<16x192xbf16, #tpu.memory_space<vmem>>, %arg7: memref<16x192xf32, #tpu.memory_space<vmem>>) attributes {dimension_semantics = [#tpu.dimension_semantics<parallel>, #tpu.dimension_semantics<parallel>, #tpu.dimension_semantics<arbitrary>], iteration_bounds = array<i64: 1, 1, 1>, scalar_prefetch = 0 : i64, scratch_operands = 1 : i64, tpu.core_type = #tpu.core_type<tc>, window_params = [{transform_indices = @transform_0, window_bounds = array<i64: 16, 64>}, {transform_indices = @transform_1, window_bounds = array<i64: 64, 192>}, {transform_indices = @transform_2, window_bounds = array<i64: 1, 192>}, {transform_indices = @transform_3, window_bounds = array<i64: 16, 192>}]} {
    %c0_i32 = arith.constant 0 : i32
    %0 = arith.cmpi eq, %arg2, %c0_i32 : i32
    %1 = arith.extui %0 : i1 to i32
    %c0_i32_0 = arith.constant 0 : i32
    %2 = arith.cmpi ne, %1, %c0_i32_0 : i32
    scf.if %2 {
      %cst_10 = arith.constant 0.000000e+00 : f32
      %12 = vector.broadcast %cst_10 : f32 to vector<16x192xf32>
      %c0_11 = arith.constant 0 : index
      %c0_12 = arith.constant 0 : index
      %13 = vector.load %arg7[%c0_11, %c0_12] : memref<16x192xf32, #tpu.memory_space<vmem>>, vector<16x192xf32>
      tpu.vector_store %arg7[%c0_11, %c0_12], %12 {strides = array<i32>} : memref<16x192xf32, #tpu.memory_space<vmem>>, vector<16x192xf32>,
    } else {
    }
    %c0 = arith.constant 0 : index
    %c0_1 = arith.constant 0 : index
    %3 = vector.load %arg7[%c0, %c0_1] : memref<16x192xf32, #tpu.memory_space<vmem>>, vector<16x192xf32>
    %c0_2 = arith.constant 0 : index
    %c0_3 = arith.constant 0 : index
    %4 = vector.load %arg3[%c0_2, %c0_3] : memref<16x64xbf16, #tpu.memory_space<vmem>>, vector<16x64xbf16>
    %c0_4 = arith.constant 0 : index
    %c0_5 = arith.constant 0 : index
    %5 = vector.load %arg4[%c0_4, %c0_5] : memref<64x192xbf16, #tpu.memory_space<vmem>>, vector<64x192xbf16>
    %cst = arith.constant dense<0.000000e+00> : vector<16x192xf32>
    %6 = tpu.matmul %4, %5, %cst {dimension_numbers = #tpu.dot_dimension_numbers<[1], [0], [0], [1], [0, 0, 1, 1], [], []>} : vector<16x64xbf16>, vector<64x192xbf16>, vector<16x192xf32> -> vector<16x192xf32>
    %7 = arith.addf %3, %6 : vector<16x192xf32>
    %c0_6 = arith.constant 0 : index
    %c0_7 = arith.constant 0 : index
    %8 = vector.load %arg7[%c0_6, %c0_7] : memref<16x192xf32, #tpu.memory_space<vmem>>, vector<16x192xf32>
    tpu.vector_store %arg7[%c0_6, %c0_7], %7 {strides = array<i32>} : memref<16x192xf32, #tpu.memory_space<vmem>>, vector<16x192xf32>,
    %c0_i32_8 = arith.constant 0 : i32
    %9 = arith.cmpi eq, %arg2, %c0_i32_8 : i32
    %10 = arith.extui %9 : i1 to i32
    %c0_i32_9 = arith.constant 0 : i32
    %11 = arith.cmpi ne, %10, %c0_i32_9 : i32
    scf.if %11 {
      %c0_10 = arith.constant 0 : index
      %c0_11 = arith.constant 0 : index
      %12 = vector.load %arg7[%c0_10, %c0_11] : memref<16x192xf32, #tpu.memory_space<vmem>>, vector<16x192xf32>
      %c0_12 = arith.constant 0 : index
      %c0_13 = arith.constant 0 : index
      %13 = vector.load %arg5[%c0_12, %c0_13] : memref<1x192xf32, #tpu.memory_space<vmem>>, vector<1x192xf32>
      %14 = vector.broadcast %13 : vector<1x192xf32> to vector<16x192xf32>
      %15 = arith.addf %12, %14 : vector<16x192xf32>
      %16 = arith.truncf %15 : vector<16x192xf32> to vector<16x192xbf16>
      %c0_14 = arith.constant 0 : index
      %c0_15 = arith.constant 0 : index
      %17 = vector.load %arg6[%c0_14, %c0_15] : memref<16x192xbf16, #tpu.memory_space<vmem>>, vector<16x192xbf16>
      tpu.vector_store %arg6[%c0_14, %c0_15], %16 {strides = array<i32>} : memref<16x192xbf16, #tpu.memory_space<vmem>>, vector<16x192xbf16>,
    } else {
    }
    return
  }
  func.func @transform_0(%arg0: i32, %arg1: i32, %arg2: i32) -> (i32, i32) {
    %c0_i32 = arith.constant 0 : i32
    return %arg0, %arg2 : i32, i32
  }
  func.func @transform_1(%arg0: i32, %arg1: i32, %arg2: i32) -> (i32, i32) {
    %c0_i32 = arith.constant 0 : i32
    return %arg2, %arg1 : i32, i32
  }
  func.func @transform_2(%arg0: i32, %arg1: i32, %arg2: i32) -> (i32, i32) {
    %c0_i32 = arith.constant 0 : i32
    %c0_i32_0 = arith.constant 0 : i32
    return %c0_i32, %arg1 : i32, i32
  }
  func.func @transform_3(%arg0: i32, %arg1: i32, %arg2: i32) -> (i32, i32) {
    %c0_i32 = arith.constant 0 : i32
    return %arg0, %arg1 : i32, i32
  }
}

</mosaic_0001>

<llo_original>
// kernel: tpu_custom_call.1
$region0: #{tpu_custom_call.1}
  #allocation0 [shape = 'u32[]', space=smem, size = 0x4, offset = 0x4, fixed_abs, tag = 'smem constant byte address 0x4 - core index']
  #allocation1 [shape = 'u32[144,128]{1,0:T(1,128)}', space=vmem, size = 0x12000, scoped, tag = 'internal scratch']
  #allocation2 [shape = 'f32[16,192]{1,0:T(8,128)}', space=vmem, size = 0x4000, scoped, tag = 'scratch operand']
  %s0 = inlined_call_operand.hbm [shape: bf16[16,64], index: 0, kind: input, shape index: {}]
  %s1 = inlined_call_operand.hbm [shape: bf16[64,192], index: 1, kind: input, shape index: {}]
  %s2 = inlined_call_operand.vmem [shape: f32[1,192], index: 2, kind: input, shape index: {}]
  %s3 = inlined_call_operand.hbm [shape: bf16[16,192], index: 3, kind: output, shape index: {}]
  %s4 = sld [smem:[#allocation0]]
  $region38: #{tpu_custom_call.1} parent=0
    _
  %s6 = ssub.s32 1, %s4
  %s7 = scalar_select 0, %s6, %s4
  $region1: #{tpu_custom_call.1} parent=0
    #allocation3 [shape = 'u8[4096]{0}', space=vmem, size = 0x1000, scoped, tag = 'input window, operand 0, single buffered']
    #allocation4 [shape = 's32[1]{0}', space=sflag, size = 0x4, scoped, tag = 'scoped memory for tpu_custom_call.1']
    #allocation5 [shape = 's32[1]{0}', space=sflag, size = 0x4, scoped, tag = 'scoped memory for tpu_custom_call.1']
    #allocation6 [shape = 'u8[32768]{0}', space=vmem, size = 0x8000, scoped, tag = 'input window, operand 1, single buffered']
    #allocation7 [shape = 's32[1]{0}', space=sflag, size = 0x4, scoped, tag = 'scoped memory for tpu_custom_call.1']
    #allocation8 [shape = 'u8[8192]{0}', space=vmem, size = 0x2000, scoped, tag = 'output window, operand 0, single buffered']
    %8 = vsyncpa [#allocation4], 0
    %9 = vsyncpa [#allocation7], 0
    %10 = vsyncpa [#allocation5], 0
    // Predicated region
    $region2: #{tpu_custom_call.1} parent=1 // pred_check
      _
    $region3: #{tpu_custom_call.1} parent=1 // pred_check_branch
      %12 = sbr.rel (0) target = $region5
    $region4: #{tpu_custom_call.1} parent=1 // pred_region
      %s14 = ssub.s32 128, 128
      %15 = vsyncadd [#allocation4], %s14
      %s16 = sshll.u32 [#allocation3], 4
      %s17 = int_to_ptr.vmem [resolvable:$true] %s16
      %22 = dma.hbm_to_vmem [thread:$0]  %s0, 128, %s17, [#allocation4], 64, 64, 4
    $region5: #{tpu_custom_call.1} parent=1 // pred_fallthru
      _
    // Predicated region
    $region6: #{tpu_custom_call.1} parent=1 // pred_check
      _
    $region7: #{tpu_custom_call.1} parent=1 // pred_check_branch
      %24 = sbr.rel (0) target = $region9
    $region8: #{tpu_custom_call.1} parent=1 // pred_region
      %s26 = ssub.s32 1024, 1024
      %27 = vsyncadd [#allocation7], %s26
      %s28 = sshll.u32 [#allocation6], 4
      %s29 = int_to_ptr.vmem [resolvable:$true] %s28
      %34 = dma.hbm_to_vmem [thread:$0]  %s1, 1024, %s29, [#allocation7], 128, 128, 8
    $region9: #{tpu_custom_call.1} parent=1 // pred_fallthru
      _
    // Predicated region
    $region10: #{tpu_custom_call.1} parent=1 // pred_check
      _
    $region11: #{tpu_custom_call.1} parent=1 // pred_check_branch
      %36 = sbr.rel (0) target = $region13
    $region12: #{tpu_custom_call.1} parent=1 // pred_region
      _
    $region13: #{tpu_custom_call.1} parent=1 // pred_fallthru
      _
    // Predicated region
    $region14: #{tpu_custom_call.1} parent=1 // pred_check
      _
    $region15: #{tpu_custom_call.1} parent=1 // pred_check_branch
      %38 = sbr.rel (0) target = $region17
    $region16: #{tpu_custom_call.1} parent=1 // pred_region
      %39 = dma.done [#allocation4], 128
    $region17: #{tpu_custom_call.1} parent=1 // pred_fallthru
      _
    // Predicated region
    $region18: #{tpu_custom_call.1} parent=1 // pred_check
      _
    $region19: #{tpu_custom_call.1} parent=1 // pred_check_branch
      %41 = sbr.rel (0) target = $region21
    $region20: #{tpu_custom_call.1} parent=1 // pred_region
      %42 = dma.done [#allocation7], 1024
    $region21: #{tpu_custom_call.1} parent=1 // pred_fallthru
      _
    %p44 = scmp.eq.s32.totalorder 0, 0
    // Predicated region
    $region22: #{tpu_custom_call.1} parent=1 // pred_check
      %p45 = pneg %p44
    $region23: #{tpu_custom_call.1} parent=1 // pred_check_branch
      %47 = sbr.rel (%p45) target = $region25
    $region24: #{tpu_custom_call.1} parent=1 // pred_region
      %48 = vst [vmem:[#allocation2] sm:$0xff] 0.0
      %vm49 = vcmask 523264
      %50 = vst.msk [vmem:[#allocation2 + $0x8] sm:$0xff] %vm49, 0.0
      %51 = vst [vmem:[#allocation2 + $0x10] sm:$0xff] 0.0
      %52 = vst.msk [vmem:[#allocation2 + $0x18] sm:$0xff] %vm49, 0.0
    $region25: #{tpu_custom_call.1} parent=1 // pred_fallthru
      _
    %v53 = vld [vmem:[#allocation2] sm:$0xff]
    %v54 = vld [vmem:[#allocation2 + $0x8] sm:$0xff]
    %v55 = vld [vmem:[#allocation2 + $0x10] sm:$0xff]
    %v56 = vld [vmem:[#allocation2 + $0x18] sm:$0xff]
    %v57 = vld [vmem:[#allocation3] sm:$0xf]
    %v58 = vld [vmem:[#allocation3 + $0x4] sm:$0xf]
    %v59 = vld [vmem:[#allocation6] sm:$0xff]
    %v60 = vld [vmem:[#allocation6 + $0x8] sm:$0xff]
    %v61 = vld [vmem:[#allocation6 + $0x10] sm:$0xff]
    %v62 = vld [vmem:[#allocation6 + $0x18] sm:$0xff]
    %v63 = vld [vmem:[#allocation6 + $0x20] sm:$0xff]
    %v64 = vld [vmem:[#allocation6 + $0x28] sm:$0xff]
    %v65 = vld [vmem:[#allocation6 + $0x30] sm:$0xff]
    %v66 = vld [vmem:[#allocation6 + $0x38] sm:$0xff]
    %v69 = vunpack.c.l.b16 %v57
    %v70 = vunpack.c.l.b16 %v58
    %v71 = vpack.c.b16 %v70, %v69
    %v80 = vunpack.c.l.b16 %v59
    %v81 = vunpack.c.h.b16 %v59
    %v82 = vunpack.c.l.b16 %v60
    %v83 = vunpack.c.h.b16 %v60
    %v84 = vunpack.c.l.b16 %v61
    %v85 = vunpack.c.h.b16 %v61
    %v86 = vunpack.c.l.b16 %v62
    %v87 = vunpack.c.h.b16 %v62
    %v88 = vunpack.c.l.b16 %v63
    %v89 = vunpack.c.h.b16 %v63
    %v90 = vunpack.c.l.b16 %v64
    %v91 = vunpack.c.h.b16 %v64
    %v92 = vunpack.c.l.b16 %v65
    %v93 = vunpack.c.h.b16 %v65
    %v94 = vunpack.c.l.b16 %v66
    %v95 = vunpack.c.h.b16 %v66
    %v96 = vpack.c.b16 %v82, %v80
    %v97 = vpack.c.b16 %v83, %v81
    %v98 = vpack.c.b16 %v86, %v84
    %v99 = vpack.c.b16 %v87, %v85
    %v100 = vpack.c.b16 %v90, %v88
    %v101 = vpack.c.b16 %v91, %v89
    %v102 = vpack.c.b16 %v94, %v92
    %v103 = vpack.c.b16 %v95, %v93
    %vm112 = vcmask 523264
    %v114 = vsel %vm112, %v71, 0
    %116 = vmatprep.subr.bf16.mxu0 0
    %117 = vmatpush1.bf16.msra.mxu0 0
    %118 = vmatprep.subr.bf16.mxu0 0
    %119 = vmatpush1.bf16.msra.mxu0 0
    %120 = vmatprep.subr.bf16.mxu0 0
    %121 = vmatpush1.bf16.msra.mxu0 0
    %122 = vmatprep.subr.bf16.mxu0 0
    %123 = vmatpush1.bf16.msra.mxu0 0
    %124 = vmatprep.subr.bf16.mxu0 %v103
    %125 = vmatpush1.bf16.msra.mxu0 %v102
    %126 = vmatprep.subr.bf16.mxu0 %v101
    %127 = vmatpush1.bf16.msra.mxu0 %v100
    %128 = vmatprep.subr.bf16.mxu0 %v99
    %129 = vmatpush1.bf16.msra.mxu0 %v98
    %130 = vmatprep.subr.bf16.mxu0 %v97
    %131 = vmatpush1.bf16.msra.mxu0 %v96
    %132 = vmatprep.subr.bf16.mxu0 0
    %133 = vmatpush2.bf16.msra.mxu0 0
    %134 = vmatprep.subr.bf16.mxu0 0
    %135 = vmatpush2.bf16.msra.mxu0 0
    %136 = vmatprep.subr.bf16.mxu0 0
    %137 = vmatpush2.bf16.msra.mxu0 0
    %138 = vmatprep.subr.bf16.mxu0 0
    %139 = vmatpush2.bf16.msra.mxu0 0
    %140 = vmatprep.subr.bf16.mxu0 0
    %141 = vmatpush2.bf16.msra.mxu0 0
    %142 = vmatprep.subr.bf16.mxu0 0
    %143 = vmatpush2.bf16.msra.mxu0 0
    %144 = vmatprep.subr.bf16.mxu0 0
    %145 = vmatpush2.bf16.msra.mxu0 0
    %146 = vmatprep.subr.bf16.mxu0 0
    %147 = vmatpush2.bf16.msra.mxu0 0
    %148 = vmatprep.mubr.bf16.mxu0 0
    %149 = vmatmul.mubr.bf16.gmra.mxu0 %v114
    %v150 = vpop.f32.mrf.mxu0
    %v151 = vadd.f32 0.0, %v150
    %v152 = vpop.f32.mrf.mxu0
    %v153 = vadd.f32 0.0, %v152
    %v154 = vpop.f32.mrf.mxu0
    %v155 = vadd.f32 0.0, %v154
    %v156 = vpop.f32.mrf.mxu0
    %v157 = vadd.f32 0.0, %v156
    %158 = vdwg.mxu0
    %v159 = vadd.f32 %v53, %v151
    %v160 = vadd.f32 %v54, %v153
    %v161 = vadd.f32 %v55, %v155
    %v162 = vadd.f32 %v56, %v157
    %163 = vst [vmem:[#allocation2] sm:$0xff] %v159
    %164 = vst.msk [vmem:[#allocation2 + $0x8] sm:$0xff] %vm112, %v160
    %165 = vst [vmem:[#allocation2 + $0x10] sm:$0xff] %v161
    %166 = vst.msk [vmem:[#allocation2 + $0x18] sm:$0xff] %vm112, %v162
    // Predicated region
    $region26: #{tpu_custom_call.1} parent=1 // pred_check
      %p167 = pneg %p44
    $region27: #{tpu_custom_call.1} parent=1 // pred_check_branch
      %169 = sbr.rel (%p167) target = $region29
    $region28: #{tpu_custom_call.1} parent=1 // pred_region
      %v170 = vld [vmem:[#allocation2] sm:$0xff]
      %v171 = vld [vmem:[#allocation2 + $0x8] sm:$0xff]
      %v172 = vld [vmem:[#allocation2 + $0x10] sm:$0xff]
      %v173 = vld [vmem:[#allocation2 + $0x18] sm:$0xff]
      %v174 = vld [vmem:[%s2] sm:$0x3]
      %v176 = vlaneseq
      %v177 = vshrl.u32 %v176, 7
      %v178 = vsub.s32 0, %v177
      %v179 = vrot.slane %v174, %v178
      %v180 = vlaneseq
      %v181 = vshrl.u32 %v180, 7
      %v182 = vsub.s32 1, %v181
      %v183 = vrot.slane %v174, %v182
      %v186 = vadd.f32 %v170, %v179
      %v187 = vadd.f32 %v171, %v183
      %v188 = vadd.f32 %v172, %v179
      %v189 = vadd.f32 %v173, %v183
      %v190 = vpack.c.bf16 %v188, %v186
      %v191 = vpack.c.bf16 %v189, %v187
      %v194 = vunpack.c.l.b16 %v190
      %v195 = vunpack.c.l.b16 %v191
      %v196 = vunpack.c.h.b16 %v190
      %v197 = vunpack.c.h.b16 %v191
      %v198 = vpack.c.b16 %v195, %v194
      %v199 = vpack.c.b16 %v197, %v196
      %vm202 = vcmask 1043456
      %vm203 = vcmask 523268
      %vm204 = vmor %vm203, %vm202
      %205 = vst.msk [vmem:[#allocation8] sm:$0xff] %vm204, %v198
      %206 = vst.msk [vmem:[#allocation8 + $0x8] sm:$0xff] %vm204, %v199
    $region29: #{tpu_custom_call.1} parent=1 // pred_fallthru
      _
    // Predicated region
    $region30: #{tpu_custom_call.1} parent=1 // pred_check
      _
    $region31: #{tpu_custom_call.1} parent=1 // pred_check_branch
      %208 = sbr.rel (0) target = $region33
    $region32: #{tpu_custom_call.1} parent=1 // pred_region
      %s210 = ssub.s32 256, 256
      %211 = vsyncadd [#allocation5], %s210
      %s212 = sshll.u32 [#allocation8], 4
      %s213 = int_to_ptr.vmem [resolvable:$true] %s212
      %218 = dma.vmem_to_hbm [thread:$0]  %s213, 256, %s3, [#allocation5], 128, 128, 8
    $region33: #{tpu_custom_call.1} parent=1 // pred_fallthru
      _
    // Predicated region
    $region34: #{tpu_custom_call.1} parent=1 // pred_check
      _
    $region35: #{tpu_custom_call.1} parent=1 // pred_check_branch
      %220 = sbr.rel (0) target = $region37
    $region36: #{tpu_custom_call.1} parent=1 // pred_region
      %221 = dma.done [#allocation5], 256
    $region37: #{tpu_custom_call.1} parent=1 // pred_fallthru
      _
    %222 = vsyncpa [#allocation4], 1
    %223 = vsyncpa [#allocation7], 1
    %224 = vsyncpa [#allocation5], 1

</llo_original>
